<compile_context>
chip_gen: v7x
topology: tpu7x:2x2x1
jax: 0.10.0
libtpu: 0.0.40
codegen_flags: <defaults>
</compile_context>

<pallas_src>
import functools

import jax
import jax.numpy as jnp
from jax.experimental import pallas as pl
from jax.experimental.pallas import tpu as pltpu


def _round_up(a, b):
    return ((a + b - 1) // b) * b


def _cdiv(a, b):
    return (a + b - 1) // b


@functools.lru_cache(maxsize=1)
def _device_info():
    """Returns (has_bf16_valu, physical_vmem_bytes); robust across jax builds."""
    kind = ""
    try:
        kind = jax.devices()[0].device_kind.lower()
    except Exception:
        pass
    has_bf16_valu = "v5" not in kind          # v5e has no bf16 VALU/EUP
    vmem = None
    try:
        info = pltpu.get_tpu_info()
        vmem = int(getattr(info, "vmem_capacity_bytes", 0)) or None
    except Exception:
        vmem = None
    if vmem is None:
        vmem = 64 * 1024 * 1024               # conservative default (v7x per-TC)
    return has_bf16_valu, vmem


def _attention_kernel(g_ref, x_ref, wg_ref, wx_ref, p_ref, out_ref, *,
                      mxu_bf16, epilogue_bf16):
    """One (batch, spatial-tile) block of the attention gate (channels-first).

    g_ref  : (F_g,  TM)   gating-signal tile (native dtype)
    x_ref  : (F_l,  TM)   skip-connection tile (native dtype)
    wg_ref : (F_int, F_g) BN-folded W_g conv weight (transposed)
    wx_ref : (F_int, F_l) BN-folded W_x conv weight (transposed)
    p_ref  : (F_int, 3)   packed small params: [:,0]=bg+bx, [:,1]=wpsi, [:,2]=bpsi
    out_ref: (F_l,  TM)   x * sigmoid(psi)
    """
    g = g_ref[...]
    x = x_ref[...]

    # MXU operands (optionally bf16); accumulation is always f32.
    if mxu_bf16 and g.dtype != jnp.bfloat16:
        gm = g.astype(jnp.bfloat16)
        xm = x.astype(jnp.bfloat16)
    else:
        gm, xm = g, x

    b_sum = p_ref[:, 0:1]      # (F_int, 1) fused conv biases (bg + bx)
    wpsi = p_ref[:, 1:2]       # (F_int, 1) psi conv weight
    bpsi = p_ref[0:1, 2:3]     # (1, 1)     psi conv bias

    # 1x1x1 conv (+ folded BN) == channel matmul; single bias add after summing.
    h = jnp.dot(wg_ref[...], gm, preferred_element_type=jnp.float32)
    h = h + jnp.dot(wx_ref[...], xm, preferred_element_type=jnp.float32)
    h = jnp.maximum(h + b_sum, 0.0)                       # ReLU (VPU, f32)

    # psi conv has a single output channel -> sublane reduce (XLU) + EUP sigmoid.
    psi_pre = jnp.sum(h * wpsi, axis=0, keepdims=True) + bpsi
    psi = jax.nn.sigmoid(psi_pre)                         # (1, TM), f32

    if epilogue_bf16:
        # v6e/v7x: keep the largest tensor in bf16 through the epilogue.
        out_ref[...] = (x * psi.astype(x.dtype)).astype(out_ref.dtype)
    else:
        out_ref[...] = (x.astype(jnp.float32) * psi).astype(out_ref.dtype)


def _fold_bn(w, b, gamma, beta, mean, var, eps):
    """Fold eval-mode BatchNorm into a 1x1x1 conv: y = (z@W + b)*s + t."""
    s = gamma / jnp.sqrt(var + eps)
    t = beta - mean * s
    return w * s[None, :], b * s + t


@functools.partial(jax.jit, static_argnames=("tile_m",))
def attention_block(g, x, params, tile_m=None, eps=1e-5):
    """g: (N, F_g, D, H, W), x: (N, F_l, D, H, W)  ->  (N, F_l, D, H, W)."""
    N, F_g, D, H, W = g.shape
    _, F_l, _, _, _ = x.shape

    wg, bg = _fold_bn(params["wg"], params["bg"], params["g_gamma"],
                      params["g_beta"], params["g_mean"], params["g_var"], eps)
    wx, bx = _fold_bn(params["wx"], params["bx"], params["x_gamma"],
                      params["x_beta"], params["x_mean"], params["x_var"], eps)
    wpsi, bpsi = _fold_bn(params["wpsi"], params["bpsi"], params["p_gamma"],
                          params["p_beta"], params["p_mean"], params["p_var"], eps)
    F_int = wg.shape[1]

    has_bf16_valu, phys_vmem = _device_info()

    in_dtype = x.dtype
    # bf16 MXU operands for bf16 inputs, or for f32 inputs with large F_int
    # (keeps the kernel firmly HBM-bound); exact f32 otherwise.
    mxu_bf16 = bool(in_dtype == jnp.bfloat16) or (F_int >= 256)
    mxu_dtype = jnp.bfloat16 if mxu_bf16 else jnp.float32
    # bf16 epilogue only where the VALU supports it (not v5e).
    epilogue_bf16 = bool(in_dtype == jnp.bfloat16) and has_bf16_valu

    wgT = jnp.transpose(wg).astype(mxu_dtype)             # (F_int, F_g)
    wxT = jnp.transpose(wx).astype(mxu_dtype)             # (F_int, F_l)
    # Pack the tiny per-channel params into one ref (fewer DMA streams/buffers).
    packed = jnp.stack(
        [(bg + bx).astype(jnp.float32),
         wpsi.reshape(F_int).astype(jnp.float32),
         jnp.broadcast_to(bpsi.astype(jnp.float32), (F_int,))],
        axis=1)                                            # (F_int, 3)

    # Channels-first: free reshape of the contiguous NCDHW layout, no copy.
    S = D * H * W
    g3 = g.reshape(N, F_g, S)
    x3 = x.reshape(N, F_l, S)

    g_item = jnp.dtype(g.dtype).itemsize
    x_item = jnp.dtype(x.dtype).itemsize
    out_item = x_item

    # ---- spatial tile from a per-generation VMEM budget ----
    per_lane = 2 * (F_g * g_item + F_l * x_item + F_l * out_item)   # 2x buffered
    per_lane += 4 * (F_int + 2)                 # f32 intermediates (h, psi)
    weight_bytes = 2 * (_round_up(F_int, 8)
                        * (_round_up(F_g, 128) + _round_up(F_l, 128))
                        * jnp.dtype(mxu_dtype).itemsize
                        + _round_up(F_int, 8) * 128 * 4)
    data_budget = min(phys_vmem // 2, 48 << 20) - weight_bytes - (2 << 20)
    data_budget = max(data_budget, 256 * per_lane)
    tile_cap = max(128, (data_budget // per_lane) // 128 * 128)
    if tile_m is not None:
        tile_cap = min(tile_cap, max(128, _round_up(int(tile_m), 128)))

    # Load balance across the 2 TensorCores on v7x: keep >= 2 grid blocks.
    min_s_tiles = 2 if (N % 2 == 1 and S > 256) else 1

    if min_s_tiles == 1 and tile_cap >= S:
        tile = S                                 # single full-extent block
    else:
        tile = min(tile_cap, max(128, _round_up(_cdiv(S, min_s_tiles), 128)))
        if S % 128 == 0:                         # prefer exact divisor (no ragged block)
            t = tile
            while t >= 128 and S % t != 0:
                t -= 128
            if t >= 128:
                tile = t

    num_s = _cdiv(S, tile)                       # ragged last block handled by Pallas
    grid = (N, num_s)

    # Explicit scoped-VMEM limit: v5e default is only 16 MiB; v7x physical is 64 MiB.
    slab_bytes = 2 * tile * (F_g * g_item + F_l * x_item + F_l * out_item)
    vmem_needed = slab_bytes + weight_bytes + (4 << 20)
    vmem_limit = int(min(int(phys_vmem * 0.9), max(vmem_needed, 32 << 20)))

    cost = pl.CostEstimate(
        flops=int(2 * N * S * F_int * (F_g + F_l) + 3 * N * S * F_int),
        transcendentals=int(N * S),
        bytes_accessed=int(N * S * (F_g * g_item + F_l * x_item + F_l * out_item)),
    )

    kernel = functools.partial(_attention_kernel,
                               mxu_bf16=mxu_bf16, epilogue_bf16=epilogue_bf16)
    wspec = lambda shape: pl.BlockSpec(shape, lambda n, i: (0, 0))

    # NOTE: deeper buffering (pipeline_mode=pl.Buffered(3)) only if profiling
    # still shows exposed DMA after the tile enlargement; skipped by default.
    out3 = pl.pallas_call(
        kernel,
        out_shape=jax.ShapeDtypeStruct((N, F_l, S), x.dtype),
        grid_spec=pltpu.PrefetchScalarGridSpec(
            num_scalar_prefetch=0,
            grid=grid,
            in_specs=[
                pl.BlockSpec((None, F_g, tile), lambda n, i: (n, 0, i)),
                pl.BlockSpec((None, F_l, tile), lambda n, i: (n, 0, i)),
                wspec((F_int, F_g)),
                wspec((F_int, F_l)),
                wspec((F_int, 3)),
            ],
            out_specs=pl.BlockSpec((None, F_l, tile), lambda n, i: (n, 0, i)),
        ),
        compiler_params=pltpu.CompilerParams(
            dimension_semantics=("parallel", "parallel"),
            vmem_limit_bytes=vmem_limit),
        cost_estimate=cost,
    )(g3, x3, wgT, wxT, packed)

    return out3.reshape(N, F_l, D, H, W)


def _reference(g, x, params, eps=1e-5):
    """Pure-JAX reference of the PyTorch forward (eval-mode BN)."""
    def conv_bn(z, w, b, gamma, beta, mean, var):
        y = jnp.einsum("ncdhw,co->nodhw", z, w) + b[None, :, None, None, None]
        s = gamma / jnp.sqrt(var + eps)
        t = beta - mean * s
        return y * s[None, :, None, None, None] + t[None, :, None, None, None]

    g1 = conv_bn(g, params["wg"], params["bg"], params["g_gamma"],
                 params["g_beta"], params["g_mean"], params["g_var"])
    x1 = conv_bn(x, params["wx"], params["bx"], params["x_gamma"],
                 params["x_beta"], params["x_mean"], params["x_var"])
    h = jnp.maximum(g1 + x1, 0.0)
    psi = conv_bn(h, params["wpsi"], params["bpsi"], params["p_gamma"],
                  params["p_beta"], params["p_mean"], params["p_var"])
    psi = jax.nn.sigmoid(psi)
    return x * psi


def make_params(key, F_g, F_l, F_int):
    ks = jax.random.split(key, 12)
    p = {
        # conv weights stored as (Cin, Cout) since kernel is 1x1x1
        "wg":   jax.random.normal(ks[0], (F_g, F_int), jnp.float32) * 0.3,
        "bg":   jax.random.normal(ks[1], (F_int,), jnp.float32) * 0.1,
        "wx":   jax.random.normal(ks[2], (F_l, F_int), jnp.float32) * 0.3,
        "bx":   jax.random.normal(ks[3], (F_int,), jnp.float32) * 0.1,
        "wpsi": jax.random.normal(ks[4], (F_int, 1), jnp.float32) * 0.3,
        "bpsi": jax.random.normal(ks[5], (1,), jnp.float32) * 0.1,
        # BN (eval-mode running stats + affine)
        "g_gamma": 1.0 + 0.1 * jax.random.normal(ks[6], (F_int,), jnp.float32),
        "g_beta":  0.1 * jax.random.normal(ks[7], (F_int,), jnp.float32),
        "g_mean":  0.05 * jax.random.normal(ks[8], (F_int,), jnp.float32),
        "g_var":   jnp.abs(1.0 + 0.1 * jax.random.normal(ks[9], (F_int,), jnp.float32)),
        "x_gamma": 1.0 + 0.1 * jax.random.normal(ks[10], (F_int,), jnp.float32),
        "x_beta":  jnp.zeros((F_int,), jnp.float32),
        "x_mean":  jnp.zeros((F_int,), jnp.float32),
        "x_var":   jnp.ones((F_int,), jnp.float32),
        "p_gamma": jnp.ones((1,), jnp.float32),
        "p_beta":  jnp.zeros((1,), jnp.float32),
        "p_mean":  jnp.zeros((1,), jnp.float32),
        "p_var":   jnp.ones((1,), jnp.float32),
    }
    return p


if __name__ == "__main__":
    key = jax.random.PRNGKey(0)
    k_g, k_x, k_p = jax.random.split(key, 3)

    N, F_g, F_l, F_int = 2, 4, 4, 8
    D, H, W = 4, 16, 16   # S = 1024 -> single full-extent spatial tile, grid (2, 1)

    g = jax.random.normal(k_g, (N, F_g, D, H, W), jnp.float32)
    x = jax.random.normal(k_x, (N, F_l, D, H, W), jnp.float32)
    params = make_params(k_p, F_g, F_l, F_int)

    # f32 path, auto tile.
    out = jax.block_until_ready(attention_block(g, x, params))
    ref = _reference(g, x, params)
    assert out.shape == x.shape, (out.shape, x.shape)
    assert jnp.allclose(out, ref, atol=1e-5, rtol=1e-5), "f32 mismatch vs reference"

    # Ragged spatial axis (S = 3*10*13 = 390) with a forced small tile:
    # exercises the in-kernel masking of the last block (no jnp.pad fallback).
    D2, H2, W2 = 3, 10, 13
    g2 = jax.random.normal(k_g, (1, F_g, D2, H2, W2), jnp.float32)
    x2 = jax.random.normal(k_x, (1, F_l, D2, H2, W2), jnp.float32)
    out2 = jax.block_until_ready(attention_block(g2, x2, params, tile_m=128))
    ref2 = _reference(g2, x2, params)
    assert jnp.allclose(out2, ref2, atol=1e-5, rtol=1e-5), "ragged mismatch vs reference"

    # bf16 path (bf16 MXU operands; bf16 epilogue on chips with bf16 VALUs).
    gb, xb = g.astype(jnp.bfloat16), x.astype(jnp.bfloat16)
    outb = jax.block_until_ready(attention_block(gb, xb, params))
    refb = _reference(gb.astype(jnp.float32), xb.astype(jnp.float32), params)
    err = float(jnp.max(jnp.abs(outb.astype(jnp.float32) - refb)))
    assert err < 0.1, f"bf16 mismatch vs reference (max abs err {err})"

    print("KERNEL_OK")
</pallas_src>

<mosaic_0001>
module attributes {stable_mosaic.version = 11 : i64} {
  func.func @_attention_kernel(%arg0: i32, %arg1: i32, %arg2: memref<1x4x1024xf32, #tpu.memory_space<vmem>>, %arg3: memref<1x4x1024xf32, #tpu.memory_space<vmem>>, %arg4: memref<8x4xf32, #tpu.memory_space<vmem>>, %arg5: memref<8x4xf32, #tpu.memory_space<vmem>>, %arg6: memref<8x3xf32, #tpu.memory_space<vmem>>, %arg7: memref<1x4x1024xf32, #tpu.memory_space<vmem>>) attributes {dimension_semantics = [#tpu.dimension_semantics<parallel>, #tpu.dimension_semantics<parallel>], iteration_bounds = array<i64: 2, 1>, scalar_prefetch = 0 : i64, scratch_operands = 0 : i64, tpu.core_type = #tpu.core_type<tc>, window_params = [{transform_indices = @transform_0, window_bounds = array<i64: 1, 4, 1024>}, {transform_indices = @transform_1, window_bounds = array<i64: 1, 4, 1024>}, {pipeline_mode = #tpu.pipeline_mode<synchronous>, transform_indices = @transform_2, window_bounds = array<i64: 8, 4>}, {pipeline_mode = #tpu.pipeline_mode<synchronous>, transform_indices = @transform_3, window_bounds = array<i64: 8, 4>}, {pipeline_mode = #tpu.pipeline_mode<synchronous>, transform_indices = @transform_4, window_bounds = array<i64: 8, 3>}, {transform_indices = @transform_5, window_bounds = array<i64: 1, 4, 1024>}]} {
    %c0 = arith.constant 0 : index
    %c0_0 = arith.constant 0 : index
    %c0_1 = arith.constant 0 : index
    %0 = vector.load %arg2[%c0, %c0_0, %c0_1] : memref<1x4x1024xf32, #tpu.memory_space<vmem>>, vector<1x4x1024xf32>
    %1 = vector.shape_cast %0 : vector<1x4x1024xf32> to vector<4x1024xf32>
    %c0_2 = arith.constant 0 : index
    %c0_3 = arith.constant 0 : index
    %c0_4 = arith.constant 0 : index
    %2 = vector.load %arg3[%c0_2, %c0_3, %c0_4] : memref<1x4x1024xf32, #tpu.memory_space<vmem>>, vector<1x4x1024xf32>
    %3 = vector.shape_cast %2 : vector<1x4x1024xf32> to vector<4x1024xf32>
    %c0_5 = arith.constant 0 : index
    %c0_6 = arith.constant 0 : index
    %4 = vector.load %arg6[%c0_5, %c0_6] : memref<8x3xf32, #tpu.memory_space<vmem>>, vector<8x1xf32>
    %c0_7 = arith.constant 0 : index
    %c1 = arith.constant 1 : index
    %5 = vector.load %arg6[%c0_7, %c1] : memref<8x3xf32, #tpu.memory_space<vmem>>, vector<8x1xf32>
    %c0_8 = arith.constant 0 : index
    %c2 = arith.constant 2 : index
    %6 = vector.load %arg6[%c0_8, %c2] : memref<8x3xf32, #tpu.memory_space<vmem>>, vector<1x1xf32>
    %c0_9 = arith.constant 0 : index
    %c0_10 = arith.constant 0 : index
    %7 = vector.load %arg4[%c0_9, %c0_10] : memref<8x4xf32, #tpu.memory_space<vmem>>, vector<8x4xf32>
    %cst = arith.constant dense<0.000000e+00> : vector<8x1024xf32>
    %8 = tpu.matmul %7, %1, %cst {dimension_numbers = #tpu.dot_dimension_numbers<[1], [0], [0], [1], [0, 0, 1, 1], [], []>} : vector<8x4xf32>, vector<4x1024xf32>, vector<8x1024xf32> -> vector<8x1024xf32>
    %c0_11 = arith.constant 0 : index
    %c0_12 = arith.constant 0 : index
    %9 = vector.load %arg5[%c0_11, %c0_12] : memref<8x4xf32, #tpu.memory_space<vmem>>, vector<8x4xf32>
    %cst_13 = arith.constant dense<0.000000e+00> : vector<8x1024xf32>
    %10 = tpu.matmul %9, %3, %cst_13 {dimension_numbers = #tpu.dot_dimension_numbers<[1], [0], [0], [1], [0, 0, 1, 1], [], []>} : vector<8x4xf32>, vector<4x1024xf32>, vector<8x1024xf32> -> vector<8x1024xf32>
    %11 = arith.addf %8, %10 : vector<8x1024xf32>
    %12 = vector.broadcast %4 : vector<8x1xf32> to vector<8x1024xf32>
    %13 = arith.addf %11, %12 : vector<8x1024xf32>
    %cst_14 = arith.constant 0.000000e+00 : f32
    %14 = vector.broadcast %cst_14 : f32 to vector<8x1024xf32>
    %15 = arith.maximumf %13, %14 : vector<8x1024xf32>
    %16 = vector.broadcast %5 : vector<8x1xf32> to vector<8x1024xf32>
    %17 = arith.mulf %15, %16 : vector<8x1024xf32>
    %cst_15 = arith.constant dense<0.000000e+00> : vector<1024xf32>
    %18 = vector.multi_reduction <add>, %17, %cst_15 [0] : vector<8x1024xf32> to vector<1024xf32>
    %19 = vector.shape_cast %18 : vector<1024xf32> to vector<1x1024xf32>
    %20 = vector.broadcast %6 : vector<1x1xf32> to vector<1x1024xf32>
    %21 = arith.addf %19, %20 : vector<1x1024xf32>
    %22 = arith.negf %21 : vector<1x1024xf32>
    %23 = math.exp %22 : vector<1x1024xf32>
    %cst_16 = arith.constant 1.000000e+00 : f32
    %24 = vector.broadcast %cst_16 : f32 to vector<1x1024xf32>
    %25 = arith.addf %24, %23 : vector<1x1024xf32>
    %26 = arith.divf %24, %25 : vector<1x1024xf32>
    %27 = vector.broadcast %26 : vector<1x1024xf32> to vector<4x1024xf32>
    %28 = arith.mulf %3, %27 : vector<4x1024xf32>
    %c0_17 = arith.constant 0 : index
    %c0_18 = arith.constant 0 : index
    %c0_19 = arith.constant 0 : index
    %29 = vector.load %arg7[%c0_17, %c0_18, %c0_19] : memref<1x4x1024xf32, #tpu.memory_space<vmem>>, vector<1x4x1024xf32>
    %30 = vector.shape_cast %29 : vector<1x4x1024xf32> to vector<4x1024xf32>
    %31 = vector.shape_cast %28 : vector<4x1024xf32> to vector<1x4x1024xf32>
    tpu.vector_store %arg7[%c0_17, %c0_18, %c0_19], %31 {strides = array<i32>} : memref<1x4x1024xf32, #tpu.memory_space<vmem>>, vector<1x4x1024xf32>,
    return
  }
  func.func @transform_0(%arg0: i32, %arg1: i32) -> (i32, i32, i32) {
    %c0_i32 = arith.constant 0 : i32
    %c0_i32_0 = arith.constant 0 : i32
    return %arg0, %c0_i32, %arg1 : i32, i32, i32
  }
  func.func @transform_1(%arg0: i32, %arg1: i32) -> (i32, i32, i32) {
    %c0_i32 = arith.constant 0 : i32
    %c0_i32_0 = arith.constant 0 : i32
    return %arg0, %c0_i32, %arg1 : i32, i32, i32
  }
  func.func @transform_2(%arg0: i32, %arg1: i32) -> (i32, i32) {
    %c0_i32 = arith.constant 0 : i32
    %c0_i32_0 = arith.constant 0 : i32
    %c0_i32_1 = arith.constant 0 : i32
    return %c0_i32, %c0_i32_0 : i32, i32
  }
  func.func @transform_3(%arg0: i32, %arg1: i32) -> (i32, i32) {
    %c0_i32 = arith.constant 0 : i32
    %c0_i32_0 = arith.constant 0 : i32
    %c0_i32_1 = arith.constant 0 : i32
    return %c0_i32, %c0_i32_0 : i32, i32
  }
  func.func @transform_4(%arg0: i32, %arg1: i32) -> (i32, i32) {
    %c0_i32 = arith.constant 0 : i32
    %c0_i32_0 = arith.constant 0 : i32
    %c0_i32_1 = arith.constant 0 : i32
    return %c0_i32, %c0_i32_0 : i32, i32
  }
  func.func @transform_5(%arg0: i32, %arg1: i32) -> (i32, i32, i32) {
    %c0_i32 = arith.constant 0 : i32
    %c0_i32_0 = arith.constant 0 : i32
    return %arg0, %c0_i32, %arg1 : i32, i32, i32
  }
}

</mosaic_0001>

<llo_original>
// kernel: attention_block.1
$region0: #{attention_block.1}
  #allocation0 [shape = 'u32[]', space=smem, size = 0x4, offset = 0x4, fixed_abs, tag = 'smem constant byte address 0x4 - core index']
  #allocation1 [shape = 'u32[144,128]{1,0:T(1,128)}', space=vmem, size = 0x12000, scoped, tag = 'internal scratch']
  %s0 = inlined_call_operand.vmem [shape: f32[2,4,1024], index: 0, kind: input, shape index: {}]
  %s1 = inlined_call_operand.vmem [shape: f32[2,4,1024], index: 1, kind: input, shape index: {}]
  %s2 = inlined_call_operand.vmem [shape: f32[8,4], index: 2, kind: input, shape index: {}]
  %s3 = inlined_call_operand.vmem [shape: f32[8,4], index: 3, kind: input, shape index: {}]
  %s4 = inlined_call_operand.vmem [shape: f32[8,3], index: 4, kind: input, shape index: {}]
  %s5 = inlined_call_operand.vmem [shape: f32[2,4,1024], index: 5, kind: output, shape index: {}]
  %s6 = sld [smem:[#allocation0]]
  $region53: #{attention_block.1} parent=0
    _
  %s8 = ssub.s32 1, %s6
  %s9 = scalar_select 0, %s8, %s6
  loop: start=0, step=1, limit=4
  $region2: #{attention_block.1} parent=0 // loop_pre_header
    _
  $region3: #{attention_block.1} parent=0 // loop_header
    %s11 = sphi 0, %s15
    %p12 = scmp.ge.s32.totalorder %s11, 4
    %s18 = sphi 0, %s30
    %s19 = sphi 0, %s26
    %s20 = sphi 0, %s18
    %s21 = sphi 0, %s19
    %s22 = sphi 0, %s20
    %s23 = sphi 0, %s21
    %s35 = sphi 0, %s37
    %s38 = sphi 0, %s35
    %s39 = sphi 0, %s38
    %s55 = sphi 0, %s39
    %s63 = sphi 0, %s65
    %s66 = sphi 0, %s63
    %s67 = sphi 0, %s66
    %s83 = sphi 0, %s67
    %s87 = sphi 0, %s87
    %s89 = sphi 0, %s87
    %s90 = sphi 0, %s89
    %s104 = sphi 0, %s90
    %s108 = sphi 0, %s108
    %s110 = sphi 0, %s108
    %s111 = sphi 0, %s110
    %s125 = sphi 0, %s111
    %s129 = sphi 0, %s129
    %s131 = sphi 0, %s129
    %s132 = sphi 0, %s131
    %s146 = sphi 0, %s132
    %s154 = sphi 0, %s156
    %s157 = sphi 0, %s154
    %s158 = sphi 0, %s157
    %s174 = sphi 0, %s158
  $region4: #{attention_block.1} parent=0 // loop_header_branch
    %14 = sbr.rel (%p12) target = $region8
  $region5: #{attention_block.1} parent=0 // loop_body
    %s16 = ssub.s32 %s11, 1
    %s17 = ssub.s32 %s11, 2
    %s24 = sadd.s32 1, %s19
    %p25 = scmp.ge.s32.totalorder %s24, 1
    %s26 = scalar_select %p25, 0, %s24
    %s27 = sadd.s32 1, %s18
    %s28 = scalar_select %p25, %s27, %s18
    %p29 = scmp.ge.s32.totalorder %s28, 2
    %s30 = scalar_select %p29, 0, %s28
    %s31 = ssub.s32 %s18, %s30
    %s32 = ssub.s32 %s19, %s26
    %s33 = sor.u32 %s31, %s32
    %p34 = scmp.eq.s32.totalorder %s33, 0
    %s36 = sadd.s32 %s35, 1
    %s37 = scalar_select %p34, %s35, %s36
    %p40 = pneg %p34
    %p41 = scmp.eq.s32.totalorder %s11, 1
    %p42 = por %p40, %p41
    %p43 = scmp.ne.s32.totalorder %s35, %s38
    %p44 = scmp.eq.s32.totalorder %s11, 0
    %p45 = por %p43, %p44
    %p46 = scmp.ne.s32.totalorder %s35, %s38
    %p47 = scmp.eq.s32.totalorder %s16, 1
    %p48 = por %p46, %p47
    %p49 = scmp.ne.s32.totalorder %s38, %s39
    %p50 = scmp.eq.s32.totalorder %s16, 0
    %p51 = por %p49, %p50
    %p52 = scmp.ne.s32.totalorder %s38, %s39
    %p53 = scmp.eq.s32.totalorder %s17, 1
    %p54 = por %p52, %p53
    %p56 = scmp.ne.s32.totalorder %s39, %s55
    %p57 = scmp.eq.s32.totalorder %s17, 0
    %p58 = por %p56, %p57
    %s59 = ssub.s32 %s18, %s30
    %s60 = ssub.s32 %s19, %s26
    %s61 = sor.u32 %s59, %s60
    %p62 = scmp.eq.s32.totalorder %s61, 0
    %s64 = sadd.s32 %s63, 1
    %s65 = scalar_select %p62, %s63, %s64
    %p68 = pneg %p62
    %p69 = scmp.eq.s32.totalorder %s11, 1
    %p70 = por %p68, %p69
    %p71 = scmp.ne.s32.totalorder %s63, %s66
    %p72 = scmp.eq.s32.totalorder %s11, 0
    %p73 = por %p71, %p72
    %p74 = scmp.ne.s32.totalorder %s63, %s66
    %p75 = scmp.eq.s32.totalorder %s16, 1
    %p76 = por %p74, %p75
    %p77 = scmp.ne.s32.totalorder %s66, %s67
    %p78 = scmp.eq.s32.totalorder %s16, 0
    %p79 = por %p77, %p78
    %p80 = scmp.ne.s32.totalorder %s66, %s67
    %p81 = scmp.eq.s32.totalorder %s17, 1
    %p82 = por %p80, %p81
    %p84 = scmp.ne.s32.totalorder %s67, %s83
    %p85 = scmp.eq.s32.totalorder %s17, 0
    %p86 = por %p84, %p85
    %s88 = sadd.s32 %s87, 1
    %p91 = scmp.eq.s32.totalorder %s11, 1
    %p92 = scmp.ne.s32.totalorder %s87, %s89
    %p93 = scmp.eq.s32.totalorder %s11, 0
    %p94 = por %p92, %p93
    %p95 = scmp.ne.s32.totalorder %s87, %s89
    %p96 = scmp.eq.s32.totalorder %s16, 1
    %p97 = por %p95, %p96
    %p98 = scmp.ne.s32.totalorder %s89, %s90
    %p99 = scmp.eq.s32.totalorder %s16, 0
    %p100 = por %p98, %p99
    %p101 = scmp.ne.s32.totalorder %s89, %s90
    %p102 = scmp.eq.s32.totalorder %s17, 1
    %p103 = por %p101, %p102
    %p105 = scmp.ne.s32.totalorder %s90, %s104
    %p106 = scmp.eq.s32.totalorder %s17, 0
    %p107 = por %p105, %p106
    %s109 = sadd.s32 %s108, 1
    %p112 = scmp.eq.s32.totalorder %s11, 1
    %p113 = scmp.ne.s32.totalorder %s108, %s110
    %p114 = scmp.eq.s32.totalorder %s11, 0
    %p115 = por %p113, %p114
    %p116 = scmp.ne.s32.totalorder %s108, %s110
    %p117 = scmp.eq.s32.totalorder %s16, 1
    %p118 = por %p116, %p117
    %p119 = scmp.ne.s32.totalorder %s110, %s111
    %p120 = scmp.eq.s32.totalorder %s16, 0
    %p121 = por %p119, %p120
    %p122 = scmp.ne.s32.totalorder %s110, %s111
    %p123 = scmp.eq.s32.totalorder %s17, 1
    %p124 = por %p122, %p123
    %p126 = scmp.ne.s32.totalorder %s111, %s125
    %p127 = scmp.eq.s32.totalorder %s17, 0
    %p128 = por %p126, %p127
    %s130 = sadd.s32 %s129, 1
    %p133 = scmp.eq.s32.totalorder %s11, 1
    %p134 = scmp.ne.s32.totalorder %s129, %s131
    %p135 = scmp.eq.s32.totalorder %s11, 0
    %p136 = por %p134, %p135
    %p137 = scmp.ne.s32.totalorder %s129, %s131
    %p138 = scmp.eq.s32.totalorder %s16, 1
    %p139 = por %p137, %p138
    %p140 = scmp.ne.s32.totalorder %s131, %s132
    %p141 = scmp.eq.s32.totalorder %s16, 0
    %p142 = por %p140, %p141
    %p143 = scmp.ne.s32.totalorder %s131, %s132
    %p144 = scmp.eq.s32.totalorder %s17, 1
    %p145 = por %p143, %p144
    %p147 = scmp.ne.s32.totalorder %s132, %s146
    %p148 = scmp.eq.s32.totalorder %s17, 0
    %p149 = por %p147, %p148
    %s150 = ssub.s32 %s18, %s30
    %s151 = ssub.s32 %s19, %s26
    %s152 = sor.u32 %s150, %s151
    %p153 = scmp.eq.s32.totalorder %s152, 0
    %s155 = sadd.s32 %s154, 1
    %s156 = scalar_select %p153, %s154, %s155
    %p159 = pneg %p153
    %p160 = scmp.eq.s32.totalorder %s11, 1
    %p161 = por %p159, %p160
    %p162 = scmp.ne.s32.totalorder %s154, %s157
    %p163 = scmp.eq.s32.totalorder %s11, 0
    %p164 = por %p162, %p163
    %p165 = scmp.ne.s32.totalorder %s154, %s157
    %p166 = scmp.eq.s32.totalorder %s16, 1
    %p167 = por %p165, %p166
    %p168 = scmp.ne.s32.totalorder %s157, %s158
    %p169 = scmp.eq.s32.totalorder %s16, 0
    %p170 = por %p168, %p169
    %p171 = scmp.ne.s32.totalorder %s157, %s158
    %p172 = scmp.eq.s32.totalorder %s17, 1
    %p173 = por %p171, %p172
    %p175 = scmp.ne.s32.totalorder %s158, %s174
    %p176 = scmp.eq.s32.totalorder %s17, 0
    %p177 = por %p175, %p176
    %p178 = scmp.le.s32.totalorder 1, %s11
    %p179 = scmp.lt.s32.totalorder %s11, 3
    %p180 = pnand %p178, %p179
    %p181 = pneg %p180
    // Predicated region
    $region9: #{attention_block.1} parent=5 // pred_check
      _
    $region10: #{attention_block.1} parent=5 // pred_check_branch
      %183 = sbr.rel (%p180) target = $region12
    $region11: #{attention_block.1} parent=5 // pred_region
      %s184 = ssub.s32 %s11, 1
      // Predicated region
      $region13: #{attention_block.1} parent=11 // pred_check
        %p185 = pneg %p100
      $region14: #{attention_block.1} parent=11 // pred_check_branch
        %187 = sbr.rel (%p185) target = $region16
      $region15: #{attention_block.1} parent=11 // pred_region
        _
      $region16: #{attention_block.1} parent=11 // pred_fallthru
        _
      // Predicated region
      $region17: #{attention_block.1} parent=11 // pred_check
        %p188 = pneg %p121
      $region18: #{attention_block.1} parent=11 // pred_check_branch
        %190 = sbr.rel (%p188) target = $region20
      $region19: #{attention_block.1} parent=11 // pred_region
        _
      $region20: #{attention_block.1} parent=11 // pred_fallthru
        _
      // Predicated region
      $region21: #{attention_block.1} parent=11 // pred_check
        %p191 = pneg %p142
      $region22: #{attention_block.1} parent=11 // pred_check_branch
        %193 = sbr.rel (%p191) target = $region24
      $region23: #{attention_block.1} parent=11 // pred_region
        _
      $region24: #{attention_block.1} parent=11 // pred_fallthru
        _
    $region12: #{attention_block.1} parent=5 // pred_fallthru
      _
    %p194 = scmp.lt.s32.totalorder %s11, 2
    // Predicated region
    $region25: #{attention_block.1} parent=5 // pred_check
      %p195 = pneg %p194
    $region26: #{attention_block.1} parent=5 // pred_check_branch
      %197 = sbr.rel (%p195) target = $region28
    $region27: #{attention_block.1} parent=5 // pred_region
      // Predicated region
      $region29: #{attention_block.1} parent=27 // pred_check
        %p198 = pneg %p45
      $region30: #{attention_block.1} parent=27 // pred_check_branch
        %200 = sbr.rel (%p198) target = $region32
      $region31: #{attention_block.1} parent=27 // pred_region
        %s201 = smul.u32 8, %s19
        %p202 = scmp.lt.s32.totalorder %s18, 1
        %s203 = scalar_select %p202, %s18, 1
        %p204 = scmp.lt.s32.totalorder %s201, 7
        %s205 = scalar_select %p204, %s201, 7
        %s206 = smul.addr %s203, 8
        %s207 = sadd.s32 %s205, %s206
        %s208 = smul.addr %s207, 4
        %s209 = scalar_lea.vmem %s0, %s208
        %s210 = smul.u32 8, %s19
      $region32: #{attention_block.1} parent=27 // pred_fallthru
        _
      // Predicated region
      $region33: #{attention_block.1} parent=27 // pred_check
        %p211 = pneg %p73
      $region34: #{attention_block.1} parent=27 // pred_check_branch
        %213 = sbr.rel (%p211) target = $region36
      $region35: #{attention_block.1} parent=27 // pred_region
        %s214 = smul.u32 8, %s19
        %p215 = scmp.lt.s32.totalorder %s18, 1
        %s216 = scalar_select %p215, %s18, 1
        %p217 = scmp.lt.s32.totalorder %s214, 7
        %s218 = scalar_select %p217, %s214, 7
        %s219 = smul.addr %s216, 8
        %s220 = sadd.s32 %s218, %s219
        %s221 = smul.addr %s220, 4
        %s222 = scalar_lea.vmem %s1, %s221
        %s223 = smul.u32 8, %s19
      $region36: #{attention_block.1} parent=27 // pred_fallthru
        _
    $region28: #{attention_block.1} parent=5 // pred_fallthru
      _
    %p224 = scmp.le.s32.totalorder 1, %s11
    %p225 = scmp.lt.s32.totalorder %s11, 3
    %p226 = pnand %p224, %p225
    %p227 = pneg %p226
    // Predicated region
    $region37: #{attention_block.1} parent=5 // pred_check
      _
    $region38: #{attention_block.1} parent=5 // pred_check_branch
      %229 = sbr.rel (%p226) target = $region40
    $region39: #{attention_block.1} parent=5 // pred_region
      %s230 = ssub.s32 %s11, 1
      %s231 = smul.u32 8, %s21
      %p232 = scmp.lt.s32.totalorder %s20, 1
      %s233 = scalar_select %p232, %s20, 1
      %p234 = scmp.lt.s32.totalorder %s231, 7
      %s235 = scalar_select %p234, %s231, 7
      %s236 = smul.addr %s233, 8
      %s237 = sadd.s32 %s235, %s236
      %s238 = smul.addr %s237, 4
      %s239 = scalar_lea.vmem %s0, %s238
      %p240 = pneg %p51
      %p241 = pneg %p48
      %s242 = smul.u32 8, %s21
      %p243 = scmp.lt.s32.totalorder %s20, 1
      %s244 = scalar_select %p243, %s20, 1
      %p245 = scmp.lt.s32.totalorder %s242, 7
      %s246 = scalar_select %p245, %s242, 7
      %s247 = smul.addr %s244, 8
      %s248 = sadd.s32 %s246, %s247
      %s249 = smul.addr %s248, 4
      %s250 = scalar_lea.vmem %s1, %s249
      %p251 = pneg %p79
      %p252 = pneg %p76
      %p253 = pneg %p100
      %p254 = pneg %p97
      %p255 = pneg %p121
      %p256 = pneg %p118
      %p257 = pneg %p142
      %p258 = pneg %p139
      %p259 = pneg %p170
      %p260 = pneg %p167
      %s261 = smul.u32 8, %s21
      %p262 = scmp.lt.s32.totalorder %s20, 1
      %s263 = scalar_select %p262, %s20, 1
      %p264 = scmp.lt.s32.totalorder %s261, 7
      %s265 = scalar_select %p264, %s261, 7
      %s266 = smul.addr %s263, 8
      %s267 = sadd.s32 %s265, %s266
      %s268 = smul.addr %s267, 4
      %s269 = scalar_lea.vmem %s5, %s268
      %s270 = smul.u32 8, %s21
      %p271 = scmp.lt.s32.totalorder %s20, 1
      %s272 = scalar_select %p271, %s20, 1
      %p273 = scmp.lt.s32.totalorder %s270, 7
      %s274 = scalar_select %p273, %s270, 7
      %s275 = smul.addr %s272, 8
      %s276 = sadd.s32 %s274, %s275
      %s277 = smul.addr %s276, 4
      %s278 = scalar_lea.vmem %s0, %s277
      %s279 = smul.u32 8, %s21
      %s280 = smul.u32 8, %s21
      %p281 = scmp.lt.s32.totalorder %s20, 1
      %s282 = scalar_select %p281, %s20, 1
      %p283 = scmp.lt.s32.totalorder %s280, 7
      %s284 = scalar_select %p283, %s280, 7
      %s285 = smul.addr %s282, 8
      %s286 = sadd.s32 %s284, %s285
      %s287 = smul.addr %s286, 4
      %s288 = scalar_lea.vmem %s1, %s287
      %s289 = smul.u32 8, %s21
      %s290 = smul.u32 8, %s21
      %p291 = scmp.lt.s32.totalorder %s20, 1
      %s292 = scalar_select %p291, %s20, 1
      %p293 = scmp.lt.s32.totalorder %s290, 7
      %s294 = scalar_select %p293, %s290, 7
      %s295 = smul.addr %s292, 8
      %s296 = sadd.s32 %s294, %s295
      %s297 = smul.addr %s296, 4
      %s298 = scalar_lea.vmem %s5, %s297
      %s299 = smul.u32 8, %s21
      %v300 = vld [vmem:[%s278] sm:$0xff]
      %v301 = vld [vmem:[%s278 + $0x8] sm:$0xff]
      %v302 = vld [vmem:[%s278 + $0x10] sm:$0xff]
      %v303 = vld [vmem:[%s278 + $0x18] sm:$0xff]
      %v304 = vld [vmem:[%s288] sm:$0xff]
      %v305 = vld [vmem:[%s288 + $0x8] sm:$0xff]
      %v306 = vld [vmem:[%s288 + $0x10] sm:$0xff]
      %v307 = vld [vmem:[%s288 + $0x18] sm:$0xff]
      %v308 = vld [vmem:[%s4] sm:$0xff]
      %v309 = vld [vmem:[%s4] sm:$0x1]
      %v310 = vld [vmem:[%s2] sm:$0xff]
      %v311 = vld [vmem:[%s3] sm:$0xff]
      %v316 = vcombine.high %v304, %v304
      %v317 = vcombine.high %v305, %v305
      %v318 = vcombine.high %v306, %v306
      %v319 = vcombine.high %v307, %v307
      %vm320 = vcmask 31744
      %v322 = vsel %vm320, %v311, 0
      %vm324 = vcmask 1043456
      %v325 = vsel %vm324, %v304, 0
      %v327 = vsel %vm324, %v316, 0
      %v329 = vsel %vm324, %v305, 0
      %v331 = vsel %vm324, %v317, 0
      %v333 = vsel %vm324, %v306, 0
      %v335 = vsel %vm324, %v318, 0
      %v337 = vsel %vm324, %v307, 0
      %v339 = vsel %vm324, %v319, 0
      %341 = vmatprep.subr.mxu0 %v327
      %342 = vmatpush1.msra.mxu0 %v325
      %343 = vmatprep.subr.mxu0 0.0
      %344 = vmatpush1.msra.mxu0 0.0
      %345 = vmatprep.subr.mxu0 0.0
      %346 = vmatpush1.msra.mxu0 0.0
      %347 = vmatprep.subr.mxu0 0.0
      %348 = vmatpush1.msra.mxu0 0.0
      %349 = vmatprep.subr.mxu0 0.0
      %350 = vmatpush1.msra.mxu0 0.0
      %351 = vmatprep.subr.mxu0 0.0
      %352 = vmatpush1.msra.mxu0 0.0
      %353 = vmatprep.subr.mxu0 0.0
      %354 = vmatpush1.msra.mxu0 0.0
      %355 = vmatprep.subr.mxu0 0.0
      %356 = vmatpush1.msra.mxu0 0.0
      %357 = vmatprep.subr.mxu0 0.0
      %358 = vmatpush1.msra.mxu0 0.0
      %359 = vmatprep.subr.mxu0 0.0
      %360 = vmatpush1.msra.mxu0 0.0
      %361 = vmatprep.subr.mxu0 0.0
      %362 = vmatpush1.msra.mxu0 0.0
      %363 = vmatprep.subr.mxu0 0.0
      %364 = vmatpush1.msra.mxu0 0.0
      %365 = vmatprep.subr.mxu0 0.0
      %366 = vmatpush1.msra.mxu0 0.0
      %367 = vmatprep.subr.mxu0 0.0
      %368 = vmatpush1.msra.mxu0 0.0
      %369 = vmatprep.subr.mxu0 0.0
      %370 = vmatpush1.msra.mxu0 0.0
      %371 = vmatprep.subr.mxu0 0.0
      %372 = vmatpush1.msra.mxu0 0.0
      %373 = vmatprep.subr.mxu0 0.0
      %374 = vmatpush1.msra.mxu0 0.0
      %375 = vmatprep.subr.mxu0 0.0
      %376 = vmatpush1.msra.mxu0 0.0
      %377 = vmatprep.subr.mxu0 0.0
      %378 = vmatpush1.msra.mxu0 0.0
      %379 = vmatprep.subr.mxu0 0.0
      %380 = vmatpush1.msra.mxu0 0.0
      %381 = vmatprep.subr.mxu0 0.0
      %382 = vmatpush1.msra.mxu0 0.0
      %383 = vmatprep.subr.mxu0 0.0
      %384 = vmatpush1.msra.mxu0 0.0
      %385 = vmatprep.subr.mxu0 0.0
      %386 = vmatpush1.msra.mxu0 0.0
      %387 = vmatprep.subr.mxu0 0.0
      %388 = vmatpush1.msra.mxu0 0.0
      %389 = vmatprep.subr.mxu0 0.0
      %390 = vmatpush1.msra.mxu0 0.0
      %391 = vmatprep.subr.mxu0 0.0
      %392 = vmatpush1.msra.mxu0 0.0
      %393 = vmatprep.subr.mxu0 0.0
      %394 = vmatpush1.msra.mxu0 0.0
      %395 = vmatprep.subr.mxu0 0.0
      %396 = vmatpush1.msra.mxu0 0.0
      %397 = vmatprep.subr.mxu0 0.0
      %398 = vmatpush1.msra.mxu0 0.0
      %399 = vmatprep.subr.mxu0 0.0
      %400 = vmatpush1.msra.mxu0 0.0
      %401 = vmatprep.subr.mxu0 0.0
      %402 = vmatpush1.msra.mxu0 0.0
      %403 = vmatprep.subr.mxu0 0.0
      %404 = vmatpush1.msra.mxu0 0.0
      %405 = vmatprep.mubr.f32.mxu0 0.0
      %406 = vmatmul.mubr.f32.gmra.mrb[0].mxu0 %v322
      %v407 = vpop.f32.mrb[0].mxu0
      %v408 = vadd.f32 0.0, %v407
      %v409 = vpop.f32.mrb[0].mxu0
      %v410 = vadd.f32 0.0, %v409
      %411 = vdwg.mxu0
      %412 = vmatprep.subr.mxu0 %v331
      %413 = vmatpush1.msra.mxu0 %v329
      %414 = vmatprep.subr.mxu0 0.0
      %415 = vmatpush1.msra.mxu0 0.0
      %416 = vmatprep.subr.mxu0 0.0
      %417 = vmatpush1.msra.mxu0 0.0
      %418 = vmatprep.subr.mxu0 0.0
      %419 = vmatpush1.msra.mxu0 0.0
      %420 = vmatprep.subr.mxu0 0.0
      %421 = vmatpush1.msra.mxu0 0.0
      %422 = vmatprep.subr.mxu0 0.0
      %423 = vmatpush1.msra.mxu0 0.0
      %424 = vmatprep.subr.mxu0 0.0
      %425 = vmatpush1.msra.mxu0 0.0
      %426 = vmatprep.subr.mxu0 0.0
      %427 = vmatpush1.msra.mxu0 0.0
      %428 = vmatprep.subr.mxu0 0.0
      %429 = vmatpush1.msra.mxu0 0.0
      %430 = vmatprep.subr.mxu0 0.0
      %431 = vmatpush1.msra.mxu0 0.0
      %432 = vmatprep.subr.mxu0 0.0
      %433 = vmatpush1.msra.mxu0 0.0
      %434 = vmatprep.subr.mxu0 0.0
      %435 = vmatpush1.msra.mxu0 0.0
      %436 = vmatprep.subr.mxu0 0.0
      %437 = vmatpush1.msra.mxu0 0.0
      %438 = vmatprep.subr.mxu0 0.0
      %439 = vmatpush1.msra.mxu0 0.0
      %440 = vmatprep.subr.mxu0 0.0
      %441 = vmatpush1.msra.mxu0 0.0
      %442 = vmatprep.subr.mxu0 0.0
      %443 = vmatpush1.msra.mxu0 0.0
      %444 = vmatprep.subr.mxu0 0.0
      %445 = vmatpush1.msra.mxu0 0.0
      %446 = vmatprep.subr.mxu0 0.0
      %447 = vmatpush1.msra.mxu0 0.0
      %448 = vmatprep.subr.mxu0 0.0
      %449 = vmatpush1.msra.mxu0 0.0
      %450 = vmatprep.subr.mxu0 0.0
      %451 = vmatpush1.msra.mxu0 0.0
      %452 = vmatprep.subr.mxu0 0.0
      %453 = vmatpush1.msra.mxu0 0.0
      %454 = vmatprep.subr.mxu0 0.0
      %455 = vmatpush1.msra.mxu0 0.0
      %456 = vmatprep.subr.mxu0 0.0
      %457 = vmatpush1.msra.mxu0 0.0
      %458 = vmatprep.subr.mxu0 0.0
      %459 = vmatpush1.msra.mxu0 0.0
      %460 = vmatprep.subr.mxu0 0.0
      %461 = vmatpush1.msra.mxu0 0.0
      %462 = vmatprep.subr.mxu0 0.0
      %463 = vmatpush1.msra.mxu0 0.0
      %464 = vmatprep.subr.mxu0 0.0
      %465 = vmatpush1.msra.mxu0 0.0
      %466 = vmatprep.subr.mxu0 0.0
      %467 = vmatpush1.msra.mxu0 0.0
      %468 = vmatprep.subr.mxu0 0.0
      %469 = vmatpush1.msra.mxu0 0.0
      %470 = vmatprep.subr.mxu0 0.0
      %471 = vmatpush1.msra.mxu0 0.0
      %472 = vmatprep.subr.mxu0 0.0
      %473 = vmatpush1.msra.mxu0 0.0
      %474 = vmatprep.subr.mxu0 0.0
      %475 = vmatpush1.msra.mxu0 0.0
      %476 = vmatprep.mubr.f32.mxu0 0.0
      %477 = vmatmul.mubr.f32.gmra.mrb[0].mxu0 %v322
      %v478 = vpop.f32.mrb[0].mxu0
      %v479 = vadd.f32 0.0, %v478
      %v480 = vpop.f32.mrb[0].mxu0
      %v481 = vadd.f32 0.0, %v480
      %482 = vdwg.mxu0
      %483 = vmatprep.subr.mxu0 %v335
      %484 = vmatpush1.msra.mxu0 %v333
      %485 = vmatprep.subr.mxu0 0.0
      %486 = vmatpush1.msra.mxu0 0.0
      %487 = vmatprep.subr.mxu0 0.0
      %488 = vmatpush1.msra.mxu0 0.0
      %489 = vmatprep.subr.mxu0 0.0
      %490 = vmatpush1.msra.mxu0 0.0
      %491 = vmatprep.subr.mxu0 0.0
      %492 = vmatpush1.msra.mxu0 0.0
      %493 = vmatprep.subr.mxu0 0.0
      %494 = vmatpush1.msra.mxu0 0.0
      %495 = vmatprep.subr.mxu0 0.0
      %496 = vmatpush1.msra.mxu0 0.0
      %497 = vmatprep.subr.mxu0 0.0
      %498 = vmatpush1.msra.mxu0 0.0
      %499 = vmatprep.subr.mxu0 0.0
      %500 = vmatpush1.msra.mxu0 0.0
      %501 = vmatprep.subr.mxu0 0.0
      %502 = vmatpush1.msra.mxu0 0.0
      %503 = vmatprep.subr.mxu0 0.0
      %504 = vmatpush1.msra.mxu0 0.0
      %505 = vmatprep.subr.mxu0 0.0
      %506 = vmatpush1.msra.mxu0 0.0
      %507 = vmatprep.subr.mxu0 0.0
      %508 = vmatpush1.msra.mxu0 0.0
      %509 = vmatprep.subr.mxu0 0.0
      %510 = vmatpush1.msra.mxu0 0.0
      %511 = vmatprep.subr.mxu0 0.0
      %512 = vmatpush1.msra.mxu0 0.0
      %513 = vmatprep.subr.mxu0 0.0
      %514 = vmatpush1.msra.mxu0 0.0
      %515 = vmatprep.subr.mxu0 0.0
      %516 = vmatpush1.msra.mxu0 0.0
      %517 = vmatprep.subr.mxu0 0.0
      %518 = vmatpush1.msra.mxu0 0.0
      %519 = vmatprep.subr.mxu0 0.0
      %520 = vmatpush1.msra.mxu0 0.0
      %521 = vmatprep.subr.mxu0 0.0
      %522 = vmatpush1.msra.mxu0 0.0
      %523 = vmatprep.subr.mxu0 0.0
      %524 = vmatpush1.msra.mxu0 0.0
      %525 = vmatprep.subr.mxu0 0.0
      %526 = vmatpush1.msra.mxu0 0.0
      %527 = vmatprep.subr.mxu0 0.0
      %528 = vmatpush1.msra.mxu0 0.0
      %529 = vmatprep.subr.mxu0 0.0
      %530 = vmatpush1.msra.mxu0 0.0
      %531 = vmatprep.subr.mxu0 0.0
      %532 = vmatpush1.msra.mxu0 0.0
      %533 = vmatprep.subr.mxu0 0.0
      %534 = vmatpush1.msra.mxu0 0.0
      %535 = vmatprep.subr.mxu0 0.0
      %536 = vmatpush1.msra.mxu0 0.0
      %537 = vmatprep.subr.mxu0 0.0
      %538 = vmatpush1.msra.mxu0 0.0
      %539 = vmatprep.subr.mxu0 0.0
      %540 = vmatpush1.msra.mxu0 0.0
      %541 = vmatprep.subr.mxu0 0.0
      %542 = vmatpush1.msra.mxu0 0.0
      %543 = vmatprep.subr.mxu0 0.0
      %544 = vmatpush1.msra.mxu0 0.0
      %545 = vmatprep.subr.mxu0 0.0
      %546 = vmatpush1.msra.mxu0 0.0
      %547 = vmatprep.mubr.f32.mxu0 0.0
      %548 = vmatmul.mubr.f32.gmra.mrb[0].mxu0 %v322
      %v549 = vpop.f32.mrb[0].mxu0
      %v550 = vadd.f32 0.0, %v549
      %v551 = vpop.f32.mrb[0].mxu0
      %v552 = vadd.f32 0.0, %v551
      %553 = vdwg.mxu0
      %554 = vmatprep.subr.mxu0 %v339
      %555 = vmatpush1.msra.mxu0 %v337
      %556 = vmatprep.subr.mxu0 0.0
      %557 = vmatpush1.msra.mxu0 0.0
      %558 = vmatprep.subr.mxu0 0.0
      %559 = vmatpush1.msra.mxu0 0.0
      %560 = vmatprep.subr.mxu0 0.0
      %561 = vmatpush1.msra.mxu0 0.0
      %562 = vmatprep.subr.mxu0 0.0
      %563 = vmatpush1.msra.mxu0 0.0
      %564 = vmatprep.subr.mxu0 0.0
      %565 = vmatpush1.msra.mxu0 0.0
      %566 = vmatprep.subr.mxu0 0.0
      %567 = vmatpush1.msra.mxu0 0.0
      %568 = vmatprep.subr.mxu0 0.0
      %569 = vmatpush1.msra.mxu0 0.0
      %570 = vmatprep.subr.mxu0 0.0
      %571 = vmatpush1.msra.mxu0 0.0
      %572 = vmatprep.subr.mxu0 0.0
      %573 = vmatpush1.msra.mxu0 0.0
      %574 = vmatprep.subr.mxu0 0.0
      %575 = vmatpush1.msra.mxu0 0.0
      %576 = vmatprep.subr.mxu0 0.0
      %577 = vmatpush1.msra.mxu0 0.0
      %578 = vmatprep.subr.mxu0 0.0
      %579 = vmatpush1.msra.mxu0 0.0
      %580 = vmatprep.subr.mxu0 0.0
      %581 = vmatpush1.msra.mxu0 0.0
      %582 = vmatprep.subr.mxu0 0.0
      %583 = vmatpush1.msra.mxu0 0.0
      %584 = vmatprep.subr.mxu0 0.0
      %585 = vmatpush1.msra.mxu0 0.0
      %586 = vmatprep.subr.mxu0 0.0
      %587 = vmatpush1.msra.mxu0 0.0
      %588 = vmatprep.subr.mxu0 0.0
      %589 = vmatpush1.msra.mxu0 0.0
      %590 = vmatprep.subr.mxu0 0.0
      %591 = vmatpush1.msra.mxu0 0.0
      %592 = vmatprep.subr.mxu0 0.0
      %593 = vmatpush1.msra.mxu0 0.0
      %594 = vmatprep.subr.mxu0 0.0
      %595 = vmatpush1.msra.mxu0 0.0
      %596 = vmatprep.subr.mxu0 0.0
      %597 = vmatpush1.msra.mxu0 0.0
      %598 = vmatprep.subr.mxu0 0.0
      %599 = vmatpush1.msra.mxu0 0.0
      %600 = vmatprep.subr.mxu0 0.0
      %601 = vmatpush1.msra.mxu0 0.0
      %602 = vmatprep.subr.mxu0 0.0
      %603 = vmatpush1.msra.mxu0 0.0
      %604 = vmatprep.subr.mxu0 0.0
      %605 = vmatpush1.msra.mxu0 0.0
      %606 = vmatprep.subr.mxu0 0.0
      %607 = vmatpush1.msra.mxu0 0.0
      %608 = vmatprep.subr.mxu0 0.0
      %609 = vmatpush1.msra.mxu0 0.0
      %610 = vmatprep.subr.mxu0 0.0
      %611 = vmatpush1.msra.mxu0 0.0
      %612 = vmatprep.subr.mxu0 0.0
      %613 = vmatpush1.msra.mxu0 0.0
      %614 = vmatprep.subr.mxu0 0.0
      %615 = vmatpush1.msra.mxu0 0.0
      %616 = vmatprep.subr.mxu0 0.0
      %617 = vmatpush1.msra.mxu0 0.0
      %618 = vmatprep.mubr.f32.mxu0 0.0
      %619 = vmatmul.mubr.f32.gmra.mrb[0].mxu0 %v322
      %v620 = vpop.f32.mrb[0].mxu0
      %v621 = vadd.f32 0.0, %v620
      %v622 = vpop.f32.mrb[0].mxu0
      %v623 = vadd.f32 0.0, %v622
      %624 = vdwg.mxu0
      %v629 = vcombine.high %v300, %v300
      %v630 = vcombine.high %v301, %v301
      %v631 = vcombine.high %v302, %v302
      %v632 = vcombine.high %v303, %v303
      %v634 = vsel %vm320, %v310, 0
      %v636 = vsel %vm324, %v300, 0
      %v638 = vsel %vm324, %v629, 0
      %v640 = vsel %vm324, %v301, 0
      %v642 = vsel %vm324, %v630, 0
      %v644 = vsel %vm324, %v302, 0
      %v646 = vsel %vm324, %v631, 0
      %v648 = vsel %vm324, %v303, 0
      %v650 = vsel %vm324, %v632, 0
      %652 = vmatprep.subr.mxu0 %v638
      %653 = vmatpush1.msra.mxu0 %v636
      %654 = vmatprep.subr.mxu0 0.0
      %655 = vmatpush1.msra.mxu0 0.0
      %656 = vmatprep.subr.mxu0 0.0
      %657 = vmatpush1.msra.mxu0 0.0
      %658 = vmatprep.subr.mxu0 0.0
      %659 = vmatpush1.msra.mxu0 0.0
      %660 = vmatprep.subr.mxu0 0.0
      %661 = vmatpush1.msra.mxu0 0.0
      %662 = vmatprep.subr.mxu0 0.0
      %663 = vmatpush1.msra.mxu0 0.0
      %664 = vmatprep.subr.mxu0 0.0
      %665 = vmatpush1.msra.mxu0 0.0
      %666 = vmatprep.subr.mxu0 0.0
      %667 = vmatpush1.msra.mxu0 0.0
      %668 = vmatprep.subr.mxu0 0.0
      %669 = vmatpush1.msra.mxu0 0.0
      %670 = vmatprep.subr.mxu0 0.0
      %671 = vmatpush1.msra.mxu0 0.0
      %672 = vmatprep.subr.mxu0 0.0
      %673 = vmatpush1.msra.mxu0 0.0
      %674 = vmatprep.subr.mxu0 0.0
      %675 = vmatpush1.msra.mxu0 0.0
      %676 = vmatprep.subr.mxu0 0.0
      %677 = vmatpush1.msra.mxu0 0.0
      %678 = vmatprep.subr.mxu0 0.0
      %679 = vmatpush1.msra.mxu0 0.0
      %680 = vmatprep.subr.mxu0 0.0
      %681 = vmatpush1.msra.mxu0 0.0
      %682 = vmatprep.subr.mxu0 0.0
      %683 = vmatpush1.msra.mxu0 0.0
      %684 = vmatprep.subr.mxu0 0.0
      %685 = vmatpush1.msra.mxu0 0.0
      %686 = vmatprep.subr.mxu0 0.0
      %687 = vmatpush1.msra.mxu0 0.0
      %688 = vmatprep.subr.mxu0 0.0
      %689 = vmatpush1.msra.mxu0 0.0
      %690 = vmatprep.subr.mxu0 0.0
      %691 = vmatpush1.msra.mxu0 0.0
      %692 = vmatprep.subr.mxu0 0.0
      %693 = vmatpush1.msra.mxu0 0.0
      %694 = vmatprep.subr.mxu0 0.0
      %695 = vmatpush1.msra.mxu0 0.0
      %696 = vmatprep.subr.mxu0 0.0
      %697 = vmatpush1.msra.mxu0 0.0
      %698 = vmatprep.subr.mxu0 0.0
      %699 = vmatpush1.msra.mxu0 0.0
      %700 = vmatprep.subr.mxu0 0.0
      %701 = vmatpush1.msra.mxu0 0.0
      %702 = vmatprep.subr.mxu0 0.0
      %703 = vmatpush1.msra.mxu0 0.0
      %704 = vmatprep.subr.mxu0 0.0
      %705 = vmatpush1.msra.mxu0 0.0
      %706 = vmatprep.subr.mxu0 0.0
      %707 = vmatpush1.msra.mxu0 0.0
      %708 = vmatprep.subr.mxu0 0.0
      %709 = vmatpush1.msra.mxu0 0.0
      %710 = vmatprep.subr.mxu0 0.0
      %711 = vmatpush1.msra.mxu0 0.0
      %712 = vmatprep.subr.mxu0 0.0
      %713 = vmatpush1.msra.mxu0 0.0
      %714 = vmatprep.subr.mxu0 0.0
      %715 = vmatpush1.msra.mxu0 0.0
      %716 = vmatprep.mubr.f32.mxu0 0.0
      %717 = vmatmul.mubr.f32.gmra.mrb[0].mxu0 %v634
      %v718 = vpop.f32.mrb[0].mxu0
      %v719 = vadd.f32 %v408, %v718
      %v720 = vpop.f32.mrb[0].mxu0
      %v721 = vadd.f32 %v410, %v720
      %722 = vdwg.mxu0
      %723 = vmatprep.subr.mxu0 %v642
      %724 = vmatpush1.msra.mxu0 %v640
      %725 = vmatprep.subr.mxu0 0.0
      %726 = vmatpush1.msra.mxu0 0.0
      %727 = vmatprep.subr.mxu0 0.0
      %728 = vmatpush1.msra.mxu0 0.0
      %729 = vmatprep.subr.mxu0 0.0
      %730 = vmatpush1.msra.mxu0 0.0
      %731 = vmatprep.subr.mxu0 0.0
      %732 = vmatpush1.msra.mxu0 0.0
      %733 = vmatprep.subr.mxu0 0.0
      %734 = vmatpush1.msra.mxu0 0.0
      %735 = vmatprep.subr.mxu0 0.0
      %736 = vmatpush1.msra.mxu0 0.0
      %737 = vmatprep.subr.mxu0 0.0
      %738 = vmatpush1.msra.mxu0 0.0
      %739 = vmatprep.subr.mxu0 0.0
      %740 = vmatpush1.msra.mxu0 0.0
      %741 = vmatprep.subr.mxu0 0.0
      %742 = vmatpush1.msra.mxu0 0.0
      %743 = vmatprep.subr.mxu0 0.0
      %744 = vmatpush1.msra.mxu0 0.0
      %745 = vmatprep.subr.mxu0 0.0
      %746 = vmatpush1.msra.mxu0 0.0
      %747 = vmatprep.subr.mxu0 0.0
      %748 = vmatpush1.msra.mxu0 0.0
      %749 = vmatprep.subr.mxu0 0.0
      %750 = vmatpush1.msra.mxu0 0.0
      %751 = vmatprep.subr.mxu0 0.0
      %752 = vmatpush1.msra.mxu0 0.0
      %753 = vmatprep.subr.mxu0 0.0
      %754 = vmatpush1.msra.mxu0 0.0
      %755 = vmatprep.subr.mxu0 0.0
      %756 = vmatpush1.msra.mxu0 0.0
      %757 = vmatprep.subr.mxu0 0.0
      %758 = vmatpush1.msra.mxu0 0.0
      %759 = vmatprep.subr.mxu0 0.0
      %760 = vmatpush1.msra.mxu0 0.0
      %761 = vmatprep.subr.mxu0 0.0
      %762 = vmatpush1.msra.mxu0 0.0
      %763 = vmatprep.subr.mxu0 0.0
      %764 = vmatpush1.msra.mxu0 0.0
      %765 = vmatprep.subr.mxu0 0.0
      %766 = vmatpush1.msra.mxu0 0.0
      %767 = vmatprep.subr.mxu0 0.0
      %768 = vmatpush1.msra.mxu0 0.0
      %769 = vmatprep.subr.mxu0 0.0
      %770 = vmatpush1.msra.mxu0 0.0
      %771 = vmatprep.subr.mxu0 0.0
      %772 = vmatpush1.msra.mxu0 0.0
      %773 = vmatprep.subr.mxu0 0.0
      %774 = vmatpush1.msra.mxu0 0.0
      %775 = vmatprep.subr.mxu0 0.0
      %776 = vmatpush1.msra.mxu0 0.0
      %777 = vmatprep.subr.mxu0 0.0
      %778 = vmatpush1.msra.mxu0 0.0
      %779 = vmatprep.subr.mxu0 0.0
      %780 = vmatpush1.msra.mxu0 0.0
      %781 = vmatprep.subr.mxu0 0.0
      %782 = vmatpush1.msra.mxu0 0.0
      %783 = vmatprep.subr.mxu0 0.0
      %784 = vmatpush1.msra.mxu0 0.0
      %785 = vmatprep.subr.mxu0 0.0
      %786 = vmatpush1.msra.mxu0 0.0
      %787 = vmatprep.mubr.f32.mxu0 0.0
      %788 = vmatmul.mubr.f32.gmra.mrb[0].mxu0 %v634
      %v789 = vpop.f32.mrb[0].mxu0
      %v790 = vadd.f32 %v479, %v789
      %v791 = vpop.f32.mrb[0].mxu0
      %v792 = vadd.f32 %v481, %v791
      %793 = vdwg.mxu0
      %794 = vmatprep.subr.mxu0 %v646
      %795 = vmatpush1.msra.mxu0 %v644
      %796 = vmatprep.subr.mxu0 0.0
      %797 = vmatpush1.msra.mxu0 0.0
      %798 = vmatprep.subr.mxu0 0.0
      %799 = vmatpush1.msra.mxu0 0.0
      %800 = vmatprep.subr.mxu0 0.0
      %801 = vmatpush1.msra.mxu0 0.0
      %802 = vmatprep.subr.mxu0 0.0
      %803 = vmatpush1.msra.mxu0 0.0
      %804 = vmatprep.subr.mxu0 0.0
      %805 = vmatpush1.msra.mxu0 0.0
      %806 = vmatprep.subr.mxu0 0.0
      %807 = vmatpush1.msra.mxu0 0.0
      %808 = vmatprep.subr.mxu0 0.0
      %809 = vmatpush1.msra.mxu0 0.0
      %810 = vmatprep.subr.mxu0 0.0
      %811 = vmatpush1.msra.mxu0 0.0
      %812 = vmatprep.subr.mxu0 0.0
      %813 = vmatpush1.msra.mxu0 0.0
      %814 = vmatprep.subr.mxu0 0.0
      %815 = vmatpush1.msra.mxu0 0.0
      %816 = vmatprep.subr.mxu0 0.0
      %817 = vmatpush1.msra.mxu0 0.0
      %818 = vmatprep.subr.mxu0 0.0
      %819 = vmatpush1.msra.mxu0 0.0
      %820 = vmatprep.subr.mxu0 0.0
      %821 = vmatpush1.msra.mxu0 0.0
      %822 = vmatprep.subr.mxu0 0.0
      %823 = vmatpush1.msra.mxu0 0.0
      %824 = vmatprep.subr.mxu0 0.0
      %825 = vmatpush1.msra.mxu0 0.0
      %826 = vmatprep.subr.mxu0 0.0
      %827 = vmatpush1.msra.mxu0 0.0
      %828 = vmatprep.subr.mxu0 0.0
      %829 = vmatpush1.msra.mxu0 0.0
      %830 = vmatprep.subr.mxu0 0.0
      %831 = vmatpush1.msra.mxu0 0.0
      %832 = vmatprep.subr.mxu0 0.0
      %833 = vmatpush1.msra.mxu0 0.0
      %834 = vmatprep.subr.mxu0 0.0
      %835 = vmatpush1.msra.mxu0 0.0
      %836 = vmatprep.subr.mxu0 0.0
      %837 = vmatpush1.msra.mxu0 0.0
      %838 = vmatprep.subr.mxu0 0.0
      %839 = vmatpush1.msra.mxu0 0.0
      %840 = vmatprep.subr.mxu0 0.0
      %841 = vmatpush1.msra.mxu0 0.0
      %842 = vmatprep.subr.mxu0 0.0
      %843 = vmatpush1.msra.mxu0 0.0
      %844 = vmatprep.subr.mxu0 0.0
      %845 = vmatpush1.msra.mxu0 0.0
      %846 = vmatprep.subr.mxu0 0.0
      %847 = vmatpush1.msra.mxu0 0.0
      %848 = vmatprep.subr.mxu0 0.0
      %849 = vmatpush1.msra.mxu0 0.0
      %850 = vmatprep.subr.mxu0 0.0
      %851 = vmatpush1.msra.mxu0 0.0
      %852 = vmatprep.subr.mxu0 0.0
      %853 = vmatpush1.msra.mxu0 0.0
      %854 = vmatprep.subr.mxu0 0.0
      %855 = vmatpush1.msra.mxu0 0.0
      %856 = vmatprep.subr.mxu0 0.0
      %857 = vmatpush1.msra.mxu0 0.0
      %858 = vmatprep.mubr.f32.mxu0 0.0
      %859 = vmatmul.mubr.f32.gmra.mrb[0].mxu0 %v634
      %v860 = vpop.f32.mrb[0].mxu0
      %v861 = vadd.f32 %v550, %v860
      %v862 = vpop.f32.mrb[0].mxu0
      %v863 = vadd.f32 %v552, %v862
      %864 = vdwg.mxu0
      %865 = vmatprep.subr.mxu0 %v650
      %866 = vmatpush1.msra.mxu0 %v648
      %867 = vmatprep.subr.mxu0 0.0
      %868 = vmatpush1.msra.mxu0 0.0
      %869 = vmatprep.subr.mxu0 0.0
      %870 = vmatpush1.msra.mxu0 0.0
      %871 = vmatprep.subr.mxu0 0.0
      %872 = vmatpush1.msra.mxu0 0.0
      %873 = vmatprep.subr.mxu0 0.0
      %874 = vmatpush1.msra.mxu0 0.0
      %875 = vmatprep.subr.mxu0 0.0
      %876 = vmatpush1.msra.mxu0 0.0
      %877 = vmatprep.subr.mxu0 0.0
      %878 = vmatpush1.msra.mxu0 0.0
      %879 = vmatprep.subr.mxu0 0.0
      %880 = vmatpush1.msra.mxu0 0.0
      %881 = vmatprep.subr.mxu0 0.0
      %882 = vmatpush1.msra.mxu0 0.0
      %883 = vmatprep.subr.mxu0 0.0
      %884 = vmatpush1.msra.mxu0 0.0
      %885 = vmatprep.subr.mxu0 0.0
      %886 = vmatpush1.msra.mxu0 0.0
      %887 = vmatprep.subr.mxu0 0.0
      %888 = vmatpush1.msra.mxu0 0.0
      %889 = vmatprep.subr.mxu0 0.0
      %890 = vmatpush1.msra.mxu0 0.0
      %891 = vmatprep.subr.mxu0 0.0
      %892 = vmatpush1.msra.mxu0 0.0
      %893 = vmatprep.subr.mxu0 0.0
      %894 = vmatpush1.msra.mxu0 0.0
      %895 = vmatprep.subr.mxu0 0.0
      %896 = vmatpush1.msra.mxu0 0.0
      %897 = vmatprep.subr.mxu0 0.0
      %898 = vmatpush1.msra.mxu0 0.0
      %899 = vmatprep.subr.mxu0 0.0
      %900 = vmatpush1.msra.mxu0 0.0
      %901 = vmatprep.subr.mxu0 0.0
      %902 = vmatpush1.msra.mxu0 0.0
      %903 = vmatprep.subr.mxu0 0.0
      %904 = vmatpush1.msra.mxu0 0.0
      %905 = vmatprep.subr.mxu0 0.0
      %906 = vmatpush1.msra.mxu0 0.0
      %907 = vmatprep.subr.mxu0 0.0
      %908 = vmatpush1.msra.mxu0 0.0
      %909 = vmatprep.subr.mxu0 0.0
      %910 = vmatpush1.msra.mxu0 0.0
      %911 = vmatprep.subr.mxu0 0.0
      %912 = vmatpush1.msra.mxu0 0.0
      %913 = vmatprep.subr.mxu0 0.0
      %914 = vmatpush1.msra.mxu0 0.0
      %915 = vmatprep.subr.mxu0 0.0
      %916 = vmatpush1.msra.mxu0 0.0
      %917 = vmatprep.subr.mxu0 0.0
      %918 = vmatpush1.msra.mxu0 0.0
      %919 = vmatprep.subr.mxu0 0.0
      %920 = vmatpush1.msra.mxu0 0.0
      %921 = vmatprep.subr.mxu0 0.0
      %922 = vmatpush1.msra.mxu0 0.0
      %923 = vmatprep.subr.mxu0 0.0
      %924 = vmatpush1.msra.mxu0 0.0
      %925 = vmatprep.subr.mxu0 0.0
      %926 = vmatpush1.msra.mxu0 0.0
      %927 = vmatprep.subr.mxu0 0.0
      %928 = vmatpush1.msra.mxu0 0.0
      %929 = vmatprep.mubr.f32.mxu0 0.0
      %930 = vmatmul.mubr.f32.gmra.mrb[0].mxu0 %v634
      %v931 = vpop.f32.mrb[0].mxu0
      %v932 = vadd.f32 %v621, %v931
      %v933 = vpop.f32.mrb[0].mxu0
      %v934 = vadd.f32 %v623, %v933
      %935 = vdwg.mxu0
      %937 = vset.pattern.permute.xlu0 0
      %938 = vperm.xlu0 %937, %v308
      %v939 = vpop.permute.xlu0 %938
      %v941 = vadd.f32 %v719, %v939
      %v942 = vadd.f32 %v721, %v939
      %v943 = vadd.f32 %v790, %v939
      %v944 = vadd.f32 %v792, %v939
      %v945 = vadd.f32 %v861, %v939
      %v946 = vadd.f32 %v863, %v939
      %v947 = vadd.f32 %v932, %v939
      %v948 = vadd.f32 %v934, %v939
      %v949 = vmax.f32 %v941, 0.0
      %v950 = vmax.f32 %v942, 0.0
      %v951 = vmax.f32 %v943, 0.0
      %v952 = vmax.f32 %v944, 0.0
      %v953 = vmax.f32 %v945, 0.0
      %v954 = vmax.f32 %v946, 0.0
      %v955 = vmax.f32 %v947, 0.0
      %v956 = vmax.f32 %v948, 0.0
      %957 = vset.pattern.permute.xlu0 1
      %958 = vperm.xlu0 %957, %v308
      %v959 = vpop.permute.xlu0 %958
      %v961 = vmul.f32 %v949, %v959
      %v962 = vmul.f32 %v950, %v959
      %v963 = vmul.f32 %v951, %v959
      %v964 = vmul.f32 %v952, %v959
      %v965 = vmul.f32 %v953, %v959
      %v966 = vmul.f32 %v954, %v959
      %v967 = vmul.f32 %v955, %v959
      %v968 = vmul.f32 %v956, %v959
      %v969 = vrot.slane %v961, 4
      %v970 = vadd.f32 %v961, %v969
      %v971 = vrot.slane %v970, 2
      %v972 = vadd.f32 %v970, %v971
      %v973 = vrot.slane %v972, 1
      %v974 = vadd.f32 %v972, %v973
      %v975 = vrot.slane %v962, 4
      %v976 = vadd.f32 %v962, %v975
      %v977 = vrot.slane %v976, 2
      %v978 = vadd.f32 %v976, %v977
      %v979 = vrot.slane %v978, 1
      %v980 = vadd.f32 %v978, %v979
      %v981 = vrot.slane %v963, 4
      %v982 = vadd.f32 %v963, %v981
      %v983 = vrot.slane %v982, 2
      %v984 = vadd.f32 %v982, %v983
      %v985 = vrot.slane %v984, 1
      %v986 = vadd.f32 %v984, %v985
      %v987 = vrot.slane %v964, 4
      %v988 = vadd.f32 %v964, %v987
      %v989 = vrot.slane %v988, 2
      %v990 = vadd.f32 %v988, %v989
      %v991 = vrot.slane %v990, 1
      %v992 = vadd.f32 %v990, %v991
      %v993 = vrot.slane %v965, 4
      %v994 = vadd.f32 %v965, %v993
      %v995 = vrot.slane %v994, 2
      %v996 = vadd.f32 %v994, %v995
      %v997 = vrot.slane %v996, 1
      %v998 = vadd.f32 %v996, %v997
      %v999 = vrot.slane %v966, 4
      %v1000 = vadd.f32 %v966, %v999
      %v1001 = vrot.slane %v1000, 2
      %v1002 = vadd.f32 %v1000, %v1001
      %v1003 = vrot.slane %v1002, 1
      %v1004 = vadd.f32 %v1002, %v1003
      %v1005 = vrot.slane %v967, 4
      %v1006 = vadd.f32 %v967, %v1005
      %v1007 = vrot.slane %v1006, 2
      %v1008 = vadd.f32 %v1006, %v1007
      %v1009 = vrot.slane %v1008, 1
      %v1010 = vadd.f32 %v1008, %v1009
      %v1011 = vrot.slane %v968, 4
      %v1012 = vadd.f32 %v968, %v1011
      %v1013 = vrot.slane %v1012, 2
      %v1014 = vadd.f32 %v1012, %v1013
      %v1015 = vrot.slane %v1014, 1
      %v1016 = vadd.f32 %v1014, %v1015
      %1018 = vset.pattern.permute.xlu0 2
      %1019 = vperm.xlu0 %1018, %v309
      %v1020 = vpop.permute.xlu0 %1019
      %v1022 = vadd.f32 %v974, %v1020
      %v1023 = vadd.f32 %v980, %v1020
      %v1024 = vadd.f32 %v986, %v1020
      %v1025 = vadd.f32 %v992, %v1020
      %v1026 = vadd.f32 %v998, %v1020
      %v1027 = vadd.f32 %v1004, %v1020
      %v1028 = vadd.f32 %v1010, %v1020
      %v1029 = vadd.f32 %v1016, %v1020
      %v1030 = vxor.u32 %v1022, 2147483648
      %v1031 = vxor.u32 %v1023, 2147483648
      %v1032 = vxor.u32 %v1024, 2147483648
      %v1033 = vxor.u32 %v1025, 2147483648
      %v1034 = vxor.u32 %v1026, 2147483648
      %v1035 = vxor.u32 %v1027, 2147483648
      %v1036 = vxor.u32 %v1028, 2147483648
      %v1037 = vxor.u32 %v1029, 2147483648
      %v1038 = vmul.f32 %v1030, 1.442695
      %v1039 = vpow.pop %v1038
      %v1040 = vmul.f32 %v1031, 1.442695
      %v1041 = vpow.pop %v1040
      %v1042 = vmul.f32 %v1032, 1.442695
      %v1043 = vpow.pop %v1042
      %v1044 = vmul.f32 %v1033, 1.442695
      %v1045 = vpow.pop %v1044
      %v1046 = vmul.f32 %v1034, 1.442695
      %v1047 = vpow.pop %v1046
      %v1048 = vmul.f32 %v1035, 1.442695
      %v1049 = vpow.pop %v1048
      %v1050 = vmul.f32 %v1036, 1.442695
      %v1051 = vpow.pop %v1050
      %v1052 = vmul.f32 %v1037, 1.442695
      %v1053 = vpow.pop %v1052
      %v1054 = vadd.f32 %v1039, 1.0
      %v1055 = vadd.f32 %v1041, 1.0
      %v1056 = vadd.f32 %v1043, 1.0
      %v1057 = vadd.f32 %v1045, 1.0
      %v1058 = vadd.f32 %v1047, 1.0
      %v1059 = vadd.f32 %v1049, 1.0
      %v1060 = vadd.f32 %v1051, 1.0
      %v1061 = vadd.f32 %v1053, 1.0
      %v1062 = vrcp.pop %v1054
      %v1063 = vmul.f32 1.0, %v1062
      %v1064 = vrcp.pop %v1055
      %v1065 = vmul.f32 1.0, %v1064
      %v1066 = vrcp.pop %v1056
      %v1067 = vmul.f32 1.0, %v1066
      %v1068 = vrcp.pop %v1057
      %v1069 = vmul.f32 1.0, %v1068
      %v1070 = vrcp.pop %v1058
      %v1071 = vmul.f32 1.0, %v1070
      %v1072 = vrcp.pop %v1059
      %v1073 = vmul.f32 1.0, %v1072
      %v1074 = vrcp.pop %v1060
      %v1075 = vmul.f32 1.0, %v1074
      %v1076 = vrcp.pop %v1061
      %v1077 = vmul.f32 1.0, %v1076
      %v1078 = vlaneseq
      %v1079 = vshrl.u32 %v1078, 7
      %v1080 = vsub.s32 0, %v1079
      %v1081 = vrot.slane %v1063, %v1080
      %v1082 = vlaneseq
      %v1083 = vshrl.u32 %v1082, 7
      %v1084 = vsub.s32 0, %v1083
      %v1085 = vrot.slane %v1065, %v1084
      %v1086 = vlaneseq
      %v1087 = vshrl.u32 %v1086, 7
      %v1088 = vsub.s32 0, %v1087
      %v1089 = vrot.slane %v1067, %v1088
      %v1090 = vlaneseq
      %v1091 = vshrl.u32 %v1090, 7
      %v1092 = vsub.s32 0, %v1091
      %v1093 = vrot.slane %v1069, %v1092
      %v1094 = vlaneseq
      %v1095 = vshrl.u32 %v1094, 7
      %v1096 = vsub.s32 0, %v1095
      %v1097 = vrot.slane %v1071, %v1096
      %v1098 = vlaneseq
      %v1099 = vshrl.u32 %v1098, 7
      %v1100 = vsub.s32 0, %v1099
      %v1101 = vrot.slane %v1073, %v1100
      %v1102 = vlaneseq
      %v1103 = vshrl.u32 %v1102, 7
      %v1104 = vsub.s32 0, %v1103
      %v1105 = vrot.slane %v1075, %v1104
      %v1106 = vlaneseq
      %v1107 = vshrl.u32 %v1106, 7
      %v1108 = vsub.s32 0, %v1107
      %v1109 = vrot.slane %v1077, %v1108
      %v1118 = vcombine.low %v1081, %v1085
      %v1119 = vcombine.low %v1089, %v1093
      %v1120 = vcombine.low %v1097, %v1101
      %v1121 = vcombine.low %v1105, %v1109
      %v1126 = vmul.f32 %v304, %v1118
      %v1127 = vmul.f32 %v305, %v1119
      %v1128 = vmul.f32 %v306, %v1120
      %v1129 = vmul.f32 %v307, %v1121
      %1130 = vst [vmem:[%s298] sm:$0xff] %v1126
      %1131 = vst [vmem:[%s298 + $0x8] sm:$0xff] %v1127
      %1132 = vst [vmem:[%s298 + $0x10] sm:$0xff] %v1128
      %1133 = vst [vmem:[%s298 + $0x18] sm:$0xff] %v1129
      %s1134 = smul.u32 8, %s21
      %p1135 = scmp.lt.s32.totalorder %s20, 1
      %s1136 = scalar_select %p1135, %s20, 1
      %p1137 = scmp.lt.s32.totalorder %s1134, 7
      %s1138 = scalar_select %p1137, %s1134, 7
      %s1139 = smul.addr %s1136, 8
      %s1140 = sadd.s32 %s1138, %s1139
      %s1141 = smul.addr %s1140, 4
      %s1142 = scalar_lea.vmem %s5, %s1141
      // Predicated region
      $region41: #{attention_block.1} parent=39 // pred_check
        %p1143 = pneg %p167
      $region42: #{attention_block.1} parent=39 // pred_check_branch
        %1145 = sbr.rel (%p1143) target = $region44
      $region43: #{attention_block.1} parent=39 // pred_region
        %s1146 = smul.u32 8, %s21
      $region44: #{attention_block.1} parent=39 // pred_fallthru
        _
    $region40: #{attention_block.1} parent=5 // pred_fallthru
      _
    %p1147 = scmp.le.s32.totalorder 2, %s11
    // Predicated region
    $region45: #{attention_block.1} parent=5 // pred_check
      %p1148 = pneg %p1147
    $region46: #{attention_block.1} parent=5 // pred_check_branch
      %1150 = sbr.rel (%p1148) target = $region48
    $region47: #{attention_block.1} parent=5 // pred_region
      %s1151 = ssub.s32 %s11, 2
      // Predicated region
      $region49: #{attention_block.1} parent=47 // pred_check
        %p1152 = pneg %p173
      $region50: #{attention_block.1} parent=47 // pred_check_branch
        %1154 = sbr.rel (%p1152) target = $region52
      $region51: #{attention_block.1} parent=47 // pred_region
        %s1155 = smul.u32 8, %s23
        %p1156 = scmp.lt.s32.totalorder %s22, 1
        %s1157 = scalar_select %p1156, %s22, 1
        %p1158 = scmp.lt.s32.totalorder %s1155, 7
        %s1159 = scalar_select %p1158, %s1155, 7
        %s1160 = smul.addr %s1157, 8
        %s1161 = sadd.s32 %s1159, %s1160
        %s1162 = smul.addr %s1161, 4
        %s1163 = scalar_lea.vmem %s5, %s1162
      $region52: #{attention_block.1} parent=47 // pred_fallthru
        _
    $region48: #{attention_block.1} parent=5 // pred_fallthru
      _
  $region6: #{attention_block.1} parent=0 // loop_footer
    %s15 = sadd.s32 1, %s11
  $region7: #{attention_block.1} parent=0 // loop_footer_branch
    %10 = sbr.rel target = $region3
  $region8: #{attention_block.1} parent=0 // loop_exit
    _

</llo_original>
